<compile_context>
chip_gen: v7x
topology: tpu7x:2x2x1
jax: 0.10.0
libtpu: 0.0.40
codegen_flags: <defaults>
</compile_context>

<pallas_src>
import numpy as np
import jax
import jax.numpy as jnp
from jax import lax
from jax.experimental import pallas as pl
from jax.experimental.pallas import tpu as pltpu

BN_EPS = 1e-5


# --------------------------------- kernels ---------------------------------
def _moments_kernel(x_ref, c_ref, g_ref, s_ref):
    """Accumulate mean-shifted input moments across the innermost grid axis.

    x_ref : (Cin, HWB)  one batch element, one spatial tile (lanes = H*W tile)
    c_ref : (Cin, 1)    per-channel shift (cheap mean estimate; numerics fix)
    g_ref : (Cin, Cin)  VMEM-resident accumulator  sum_p (x-c)(x-c)^T   (MXU, K = HWB)
    s_ref : (Cin, 1)    VMEM-resident accumulator  sum_p (x-c)
    """
    @pl.when(pl.program_id(2) == 0)
    def _():
        g_ref[...] = jnp.zeros_like(g_ref)
        s_ref[...] = jnp.zeros_like(s_ref)

    xs = x_ref[...] - c_ref[...].astype(x_ref.dtype)
    # NOTE: on v6e/v7x, if pl.lower_as_mlir shows a per-block vxpose for this
    # self-transposed contraction, chunk the lane axis; not needed at these sizes.
    g_ref[...] += jnp.einsum("cp,dp->cd", xs, xs,
                             preferred_element_type=jnp.float32)
    s_ref[...] += jnp.sum(xs.astype(jnp.float32), axis=1, keepdims=True)


def _apply_kernel(x_ref, w_ref, b_ref, o_ref):
    """out = W_eff @ x + b_eff  (1x1 conv + training-mode BN folded into one affine).

    x_ref : (Cin, HWB); w_ref : (Cout, Cin); b_ref : (Cout, 1); o_ref : (Cout, HWB)
    """
    y = jnp.dot(w_ref[...], x_ref[...], preferred_element_type=jnp.float32)
    o_ref[...] = (y + b_ref[...]).astype(o_ref.dtype)


# ----------------------------- tiling helpers ------------------------------
def _vmem_limit_bytes():
    """Scoped-VMEM request: generation-aware (v7x has 64 MiB physical), with headroom."""
    cap = None
    try:
        cap = getattr(pltpu.get_tpu_info(), "vmem_capacity_bytes", None)
    except Exception:
        cap = None
    if not cap:
        cap = 128 << 20
    return int(min(48 << 20, (int(cap) * 3) // 4))


def _max_block_cols(cin, cout, itemsize, vmem_limit):
    """Largest lane-tile width whose double-buffered working set fits the budget."""
    budget = int(vmem_limit * 0.6)                  # headroom for compiler scratch
    fixed = 2 * 4 * (cin * cin + cin + cout)        # pass-1 accumulators + b_eff
    fixed += 2 * itemsize * cin * cout              # folded weights (pass 2)
    per_col = 2 * (cin + cout) * itemsize           # double-buffered x + out tiles
    cols = (budget - fixed) // max(per_col, 1)
    cols = max(128, (cols // 128) * 128)
    return int(min(8192, cols))


def _choose_hw_block(hw, max_cols):
    """Pick (hwb, hw_pad): hwb multiple of 128, padding <= ~6% over minimal 128-pad."""
    max_cols = max(128, (max_cols // 128) * 128)
    hw128 = hw + (-hw) % 128                        # minimal lane-dense padding
    best = (128, hw128)
    for blk in range(128, max_cols + 1, 128):
        padded = ((hw + blk - 1) // blk) * blk
        if padded * 16 <= hw128 * 17 and blk >= best[0]:
            best = (blk, padded)
    return best


# --------------------------------- wrapper ---------------------------------
def shortcut_forward(x_nchw, w, b, gamma, beta):
    """Pallas forward of Shortcut: 1x1 conv -> BatchNorm2d (training-mode stats)."""
    # TODO(synk): BatchNorm running_mean/running_var in-place buffer updates (a
    # training-time side effect that does not affect the returned value) are not
    # materialized; eval-mode (running-stats) BN is out of scope here.
    del b  # conv bias cancels exactly under training-mode BN (mean subtraction)

    N, Cin, H, W = x_nchw.shape
    Cout, wc, kh, kw = w.shape
    assert (wc, kh, kw) == (Cin, 1, 1)
    HW = H * W
    M = N * HW

    # dtype-polymorphic boundary: bf16 in -> bf16 streamed/bf16 out (f32 accumulate
    # inside); anything else computes in f32 to keep 1e-3-level accuracy.
    cdtype = jnp.bfloat16 if x_nchw.dtype == jnp.bfloat16 else jnp.float32
    itemsize = 2 if cdtype == jnp.bfloat16 else 4

    x3 = x_nchw.reshape(N, Cin, HW).astype(cdtype)            # lane axis = H*W
    w2f = w.reshape(Cout, Cin).astype(jnp.float32)

    # generation-aware tiling: scoped-VMEM request + lane tile sized against it
    vmem_limit = _vmem_limit_bytes()
    hwb, HW_pad = _choose_hw_block(HW, _max_block_cols(Cin, Cout, itemsize, vmem_limit))
    pad = HW_pad - HW
    x3p = jnp.pad(x3, ((0, 0), (0, 0), (0, pad))) if pad else x3
    nhw = HW_pad // hwb

    # cheap per-channel shift (avoids E[y^2]-E[y]^2 catastrophic cancellation)
    sample = min(HW, 512)
    c_shift = jnp.mean(x3[:, :, :sample].astype(jnp.float32), axis=(0, 2)).astype(cdtype)
    c32 = c_shift.astype(jnp.float32)
    c_col = c_shift[:, None]                                   # (Cin, 1)

    # ---- pass 1: VMEM-resident moment accumulators (no per-block HBM partials) ----
    # Keep a 'parallel' axis of extent >= 2 so both v7x TensorCores get work.
    n_outer = 2 if (N == 1 and nhw >= 2 and nhw % 2 == 0) else 1
    n_inner = nhw // n_outer

    g_acc, s_acc = pl.pallas_call(
        _moments_kernel,
        out_shape=(jax.ShapeDtypeStruct((N, n_outer, Cin, Cin), jnp.float32),
                   jax.ShapeDtypeStruct((N, n_outer, Cin, 1), jnp.float32)),
        grid=(N, n_outer, n_inner),
        in_specs=[pl.BlockSpec((None, Cin, hwb),
                               lambda n, p, h: (n, 0, p * n_inner + h)),
                  pl.BlockSpec((Cin, 1), lambda n, p, h: (0, 0))],
        out_specs=(pl.BlockSpec((None, None, Cin, Cin), lambda n, p, h: (n, p, 0, 0)),
                   pl.BlockSpec((None, None, Cin, 1), lambda n, p, h: (n, p, 0, 0))),
        compiler_params=pltpu.CompilerParams(
            dimension_semantics=("parallel", "parallel", "arbitrary"),
            vmem_limit_bytes=vmem_limit),
    )(x3p, c_col)

    # ---- tiny O(C^2) glue: fold conv weight + training-mode BN into one affine ----
    G = jnp.sum(g_acc, axis=(0, 1))                    # sum (x-c)(x-c)^T over real+pad
    s = jnp.sum(s_acc, axis=(0, 1))[:, 0]              # sum (x-c)
    n_pad_cols = N * pad
    if n_pad_cols:
        # zero-padded columns contribute exactly (-c) to s and c c^T to G: remove them
        G = G - float(n_pad_cols) * jnp.outer(c32, c32)
        s = s + float(n_pad_cols) * c32
    d = s / M                                          # mean(x) - c  (small after shift)
    mean_x = c32 + d
    cov = G / M - jnp.outer(d, d)                      # Cov(x), shift-invariant
    var = jnp.einsum("oc,cd,od->o", w2f, cov, w2f)     # biased var of conv(x) per out ch
    var = jnp.maximum(var, 0.0)
    scale = gamma.astype(jnp.float32) * lax.rsqrt(var + BN_EPS)
    w_eff = (scale[:, None] * w2f).astype(cdtype)                          # (Cout, Cin)
    b_eff = (beta.astype(jnp.float32) - scale * (w2f @ mean_x))[:, None]   # (Cout, 1) f32

    # ---- pass 2: lane-dense fused conv+BN apply ----
    out3 = pl.pallas_call(
        _apply_kernel,
        out_shape=jax.ShapeDtypeStruct((N, Cout, HW_pad), cdtype),
        grid=(N, nhw),
        in_specs=[pl.BlockSpec((None, Cin, hwb), lambda n, h: (n, 0, h)),
                  pl.BlockSpec((Cout, Cin), lambda n, h: (0, 0)),
                  pl.BlockSpec((Cout, 1), lambda n, h: (0, 0))],
        out_specs=pl.BlockSpec((None, Cout, hwb), lambda n, h: (n, 0, h)),
        compiler_params=pltpu.CompilerParams(
            dimension_semantics=("parallel", "parallel"),
            vmem_limit_bytes=vmem_limit),
    )(x3p, w_eff, b_eff)

    if pad:
        out3 = out3[:, :, :HW]
    return out3.reshape(N, Cout, H, W)


# ----------------------------- pure-JAX reference -----------------------------
def shortcut_ref(x, w, b, gamma, beta):
    y = lax.conv_general_dilated(x, w, (1, 1), [(0, 0), (0, 0)],
                                 dimension_numbers=("NCHW", "OIHW", "NCHW"))
    y = y + b[None, :, None, None]
    m = jnp.mean(y, axis=(0, 2, 3), keepdims=True)
    v = jnp.mean((y - m) ** 2, axis=(0, 2, 3), keepdims=True)
    return (y - m) / jnp.sqrt(v + BN_EPS) * gamma[None, :, None, None] \
        + beta[None, :, None, None]


if __name__ == "__main__":
    N, Cin, Cout, H, W = 2, 4, 8, 16, 16
    key = jax.random.PRNGKey(0)
    ks = jax.random.split(key, 5)

    x = jax.random.normal(ks[0], (N, Cin, H, W), jnp.float32)
    w = 0.2 * jax.random.normal(ks[1], (Cout, Cin, 1, 1), jnp.float32)
    b = 0.1 * jax.random.normal(ks[2], (Cout,), jnp.float32)
    gamma = 1.0 + 0.1 * jax.random.normal(ks[3], (Cout,), jnp.float32)
    beta = 0.1 * jax.random.normal(ks[4], (Cout,), jnp.float32)

    out = jax.block_until_ready(shortcut_forward(x, w, b, gamma, beta))
    ref = shortcut_ref(x, w, b, gamma, beta)
    np.testing.assert_allclose(np.asarray(out), np.asarray(ref),
                               rtol=1e-3, atol=1e-3)

    # unaligned spatial size (14x14, ResNet-style) exercises the lane-padding path
    x2 = jax.random.normal(ks[0], (1, Cin, 14, 14), jnp.float32)
    out2 = jax.block_until_ready(shortcut_forward(x2, w, b, gamma, beta))
    ref2 = shortcut_ref(x2, w, b, gamma, beta)
    np.testing.assert_allclose(np.asarray(out2), np.asarray(ref2),
                               rtol=1e-3, atol=1e-3)

    print("KERNEL_OK")
</pallas_src>

<mosaic_0001>
module attributes {stable_mosaic.version = 11 : i64} {
  func.func @_moments_kernel(%arg0: i32, %arg1: i32, %arg2: i32, %arg3: memref<1x4x256xf32, #tpu.memory_space<vmem>>, %arg4: memref<4x1xf32, #tpu.memory_space<vmem>>, %arg5: memref<1x1x4x4xf32, #tpu.memory_space<vmem>>, %arg6: memref<1x1x4x1xf32, #tpu.memory_space<vmem>>) attributes {dimension_semantics = [#tpu.dimension_semantics<parallel>, #tpu.dimension_semantics<parallel>, #tpu.dimension_semantics<arbitrary>], iteration_bounds = array<i64: 2, 1, 1>, scalar_prefetch = 0 : i64, scratch_operands = 0 : i64, tpu.core_type = #tpu.core_type<tc>, window_params = [{transform_indices = @transform_0, window_bounds = array<i64: 1, 4, 256>}, {pipeline_mode = #tpu.pipeline_mode<synchronous>, transform_indices = @transform_1, window_bounds = array<i64: 4, 1>}, {transform_indices = @transform_2, window_bounds = array<i64: 1, 1, 4, 4>}, {transform_indices = @transform_3, window_bounds = array<i64: 1, 1, 4, 1>}]} {
    %c0_i32 = arith.constant 0 : i32
    %0 = arith.cmpi eq, %arg2, %c0_i32 : i32
    %1 = arith.extui %0 : i1 to i32
    %c0_i32_0 = arith.constant 0 : i32
    %2 = arith.cmpi ne, %1, %c0_i32_0 : i32
    scf.if %2 {
      %cst_22 = arith.constant 0.000000e+00 : f32
      %23 = vector.broadcast %cst_22 : f32 to vector<4x4xf32>
      %c0_23 = arith.constant 0 : index
      %c0_24 = arith.constant 0 : index
      %c0_25 = arith.constant 0 : index
      %c0_26 = arith.constant 0 : index
      %24 = vector.load %arg5[%c0_23, %c0_24, %c0_25, %c0_26] : memref<1x1x4x4xf32, #tpu.memory_space<vmem>>, vector<1x1x4x4xf32>
      %25 = vector.shape_cast %24 : vector<1x1x4x4xf32> to vector<4x4xf32>
      %26 = vector.shape_cast %23 : vector<4x4xf32> to vector<1x1x4x4xf32>
      tpu.vector_store %arg5[%c0_23, %c0_24, %c0_25, %c0_26], %26 {strides = array<i32>} : memref<1x1x4x4xf32, #tpu.memory_space<vmem>>, vector<1x1x4x4xf32>,
      %cst_27 = arith.constant 0.000000e+00 : f32
      %27 = vector.broadcast %cst_27 : f32 to vector<4x1xf32>
      %c0_28 = arith.constant 0 : index
      %c0_29 = arith.constant 0 : index
      %c0_30 = arith.constant 0 : index
      %c0_31 = arith.constant 0 : index
      %28 = vector.load %arg6[%c0_28, %c0_29, %c0_30, %c0_31] : memref<1x1x4x1xf32, #tpu.memory_space<vmem>>, vector<1x1x4x1xf32>
      %29 = vector.shape_cast %28 : vector<1x1x4x1xf32> to vector<4x1xf32>
      %30 = vector.shape_cast %27 : vector<4x1xf32> to vector<1x1x4x1xf32>
      tpu.vector_store %arg6[%c0_28, %c0_29, %c0_30, %c0_31], %30 {strides = array<i32>} : memref<1x1x4x1xf32, #tpu.memory_space<vmem>>, vector<1x1x4x1xf32>,
    } else {
    }
    %c0 = arith.constant 0 : index
    %c0_1 = arith.constant 0 : index
    %c0_2 = arith.constant 0 : index
    %3 = vector.load %arg3[%c0, %c0_1, %c0_2] : memref<1x4x256xf32, #tpu.memory_space<vmem>>, vector<1x4x256xf32>
    %4 = vector.shape_cast %3 : vector<1x4x256xf32> to vector<4x256xf32>
    %c0_3 = arith.constant 0 : index
    %c0_4 = arith.constant 0 : index
    %5 = vector.load %arg4[%c0_3, %c0_4] : memref<4x1xf32, #tpu.memory_space<vmem>>, vector<4x1xf32>
    %6 = vector.broadcast %5 : vector<4x1xf32> to vector<4x256xf32>
    %7 = arith.subf %4, %6 : vector<4x256xf32>
    %c0_5 = arith.constant 0 : index
    %c0_6 = arith.constant 0 : index
    %c0_7 = arith.constant 0 : index
    %c0_8 = arith.constant 0 : index
    %8 = vector.load %arg5[%c0_5, %c0_6, %c0_7, %c0_8] : memref<1x1x4x4xf32, #tpu.memory_space<vmem>>, vector<1x1x4x4xf32>
    %9 = vector.shape_cast %8 : vector<1x1x4x4xf32> to vector<4x4xf32>
    "tpu.trace_start"() <{level = 10 : i32, message = "cp,dp->cd"}> : () -> ()
    %cst = arith.constant dense<0.000000e+00> : vector<4x4xf32>
    %10 = tpu.matmul %7, %7, %cst {dimension_numbers = #tpu.dot_dimension_numbers<[1], [1], [0], [0], [0, 0, 1, 0], [], []>} : vector<4x256xf32>, vector<4x256xf32>, vector<4x4xf32> -> vector<4x4xf32>
    "tpu.trace_stop"() : () -> ()
    %11 = arith.addf %9, %10 : vector<4x4xf32>
    %c0_9 = arith.constant 0 : index
    %c0_10 = arith.constant 0 : index
    %c0_11 = arith.constant 0 : index
    %c0_12 = arith.constant 0 : index
    %12 = vector.load %arg5[%c0_9, %c0_10, %c0_11, %c0_12] : memref<1x1x4x4xf32, #tpu.memory_space<vmem>>, vector<1x1x4x4xf32>
    %13 = vector.shape_cast %12 : vector<1x1x4x4xf32> to vector<4x4xf32>
    %14 = vector.shape_cast %11 : vector<4x4xf32> to vector<1x1x4x4xf32>
    tpu.vector_store %arg5[%c0_9, %c0_10, %c0_11, %c0_12], %14 {strides = array<i32>} : memref<1x1x4x4xf32, #tpu.memory_space<vmem>>, vector<1x1x4x4xf32>,
    %c0_13 = arith.constant 0 : index
    %c0_14 = arith.constant 0 : index
    %c0_15 = arith.constant 0 : index
    %c0_16 = arith.constant 0 : index
    %15 = vector.load %arg6[%c0_13, %c0_14, %c0_15, %c0_16] : memref<1x1x4x1xf32, #tpu.memory_space<vmem>>, vector<1x1x4x1xf32>
    %16 = vector.shape_cast %15 : vector<1x1x4x1xf32> to vector<4x1xf32>
    %cst_17 = arith.constant dense<0.000000e+00> : vector<4xf32>
    %17 = vector.multi_reduction <add>, %7, %cst_17 [1] : vector<4x256xf32> to vector<4xf32>
    %18 = vector.shape_cast %17 : vector<4xf32> to vector<4x1xf32>
    %19 = arith.addf %16, %18 : vector<4x1xf32>
    %c0_18 = arith.constant 0 : index
    %c0_19 = arith.constant 0 : index
    %c0_20 = arith.constant 0 : index
    %c0_21 = arith.constant 0 : index
    %20 = vector.load %arg6[%c0_18, %c0_19, %c0_20, %c0_21] : memref<1x1x4x1xf32, #tpu.memory_space<vmem>>, vector<1x1x4x1xf32>
    %21 = vector.shape_cast %20 : vector<1x1x4x1xf32> to vector<4x1xf32>
    %22 = vector.shape_cast %19 : vector<4x1xf32> to vector<1x1x4x1xf32>
    tpu.vector_store %arg6[%c0_18, %c0_19, %c0_20, %c0_21], %22 {strides = array<i32>} : memref<1x1x4x1xf32, #tpu.memory_space<vmem>>, vector<1x1x4x1xf32>,
    return
  }
  func.func @transform_0(%arg0: i32, %arg1: i32, %arg2: i32) -> (i32, i32, i32) {
    %c1_i32 = arith.constant 1 : i32
    %0 = arith.muli %arg1, %c1_i32 : i32
    %1 = arith.addi %0, %arg2 : i32
    %c0_i32 = arith.constant 0 : i32
    %c0_i32_0 = arith.constant 0 : i32
    return %arg0, %c0_i32, %1 : i32, i32, i32
  }
  func.func @transform_1(%arg0: i32, %arg1: i32, %arg2: i32) -> (i32, i32) {
    %c0_i32 = arith.constant 0 : i32
    %c0_i32_0 = arith.constant 0 : i32
    %c0_i32_1 = arith.constant 0 : i32
    return %c0_i32, %c0_i32_0 : i32, i32
  }
  func.func @transform_2(%arg0: i32, %arg1: i32, %arg2: i32) -> (i32, i32, i32, i32) {
    %c0_i32 = arith.constant 0 : i32
    %c0_i32_0 = arith.constant 0 : i32
    %c0_i32_1 = arith.constant 0 : i32
    return %arg0, %arg1, %c0_i32, %c0_i32_0 : i32, i32, i32, i32
  }
  func.func @transform_3(%arg0: i32, %arg1: i32, %arg2: i32) -> (i32, i32, i32, i32) {
    %c0_i32 = arith.constant 0 : i32
    %c0_i32_0 = arith.constant 0 : i32
    %c0_i32_1 = arith.constant 0 : i32
    return %arg0, %arg1, %c0_i32, %c0_i32_0 : i32, i32, i32, i32
  }
}

</mosaic_0001>

<llo_original>
// kernel: tpu_custom_call.1
$region0: #{tpu_custom_call.1}
  #allocation0 [shape = 'u32[]', space=smem, size = 0x4, offset = 0x4, fixed_abs, tag = 'smem constant byte address 0x4 - core index']
  #allocation1 [shape = 'u32[144,128]{1,0:T(1,128)}', space=vmem, size = 0x12000, scoped, tag = 'internal scratch']
  %s0 = inlined_call_operand.hbm [shape: f32[2,4,256], index: 0, kind: input, shape index: {}]
  %s1 = inlined_call_operand.vmem [shape: f32[4,1], index: 1, kind: input, shape index: {}]
  %s2 = inlined_call_operand.hbm [shape: f32[2,1,4,4], index: 2, kind: output, shape index: {0}]
  %s3 = inlined_call_operand.vmem [shape: f32[2,1,4,1], index: 3, kind: output, shape index: {1}]
  %4 = xla_tuple %s2, %s3
  %s5 = sld [smem:[#allocation0]]
  $region57: #{tpu_custom_call.1} parent=0
    _
  %s7 = ssub.s32 1, %s5
  %s8 = scalar_select 0, %s7, %s5
  $region1: #{tpu_custom_call.1} parent=0
    #allocation2 [shape = 'u8[8192]{0}', space=vmem, size = 0x2000, scoped, tag = 'input window, operand 0']
    #allocation3 [shape = 's32[2]{0}', space=sflag, size = 0x8, scoped, tag = 'scoped memory for tpu_custom_call.1']
    #allocation4 [shape = 's32[2]{0}', space=sflag, size = 0x8, scoped, tag = 'scoped memory for tpu_custom_call.1']
    #allocation5 [shape = 'u8[4096]{0}', space=vmem, size = 0x1000, scoped, tag = 'output window, operand 0']
    %9 = vsyncpa [#allocation3], 0
    %s10 = scalar_lea.sflag [#allocation3], 1
    %11 = vsyncpa %s10, 0
    %12 = vsyncpa [#allocation4], 0
    %s13 = scalar_lea.sflag [#allocation4], 1
    %14 = vsyncpa %s13, 0
    loop: start=0, step=1, limit=4
    $region2: #{tpu_custom_call.1} parent=1 // loop_pre_header
      _
    $region3: #{tpu_custom_call.1} parent=1 // loop_header
      %s16 = sphi 0, %s20
      %p17 = scmp.ge.s32.totalorder %s16, 4
      %s23 = sphi 0, %s42
      %s24 = sphi 0, %s38
      %s25 = sphi 0, %s34
      %s26 = sphi 0, %s23
      %s27 = sphi 0, %s24
      %s28 = sphi 0, %s25
      %s29 = sphi 0, %s26
      %s30 = sphi 0, %s27
      %s31 = sphi 0, %s28
      %s49 = sphi 0, %s51
      %s52 = sphi 0, %s49
      %s53 = sphi 0, %s52
      %s69 = sphi 0, %s53
      %s73 = sphi 0, %s73
      %s75 = sphi 0, %s73
      %s76 = sphi 0, %s75
      %s90 = sphi 0, %s76
      %s98 = sphi 0, %s100
      %s101 = sphi 0, %s98
      %s102 = sphi 0, %s101
      %s118 = sphi 0, %s102
      %s126 = sphi 0, %s128
      %s129 = sphi 0, %s126
      %s130 = sphi 0, %s129
      %s146 = sphi 0, %s130
    $region4: #{tpu_custom_call.1} parent=1 // loop_header_branch
      %19 = sbr.rel (%p17) target = $region8
    $region5: #{tpu_custom_call.1} parent=1 // loop_body
      %s21 = ssub.s32 %s16, 1
      %s22 = ssub.s32 %s16, 2
      %s32 = sadd.s32 1, %s25
      %p33 = scmp.ge.s32.totalorder %s32, 1
      %s34 = scalar_select %p33, 0, %s32
      %s35 = sadd.s32 1, %s24
      %s36 = scalar_select %p33, %s35, %s24
      %p37 = scmp.ge.s32.totalorder %s36, 1
      %s38 = scalar_select %p37, 0, %s36
      %s39 = sadd.s32 1, %s23
      %s40 = scalar_select %p37, %s39, %s23
      %p41 = scmp.ge.s32.totalorder %s40, 2
      %s42 = scalar_select %p41, 0, %s40
      %s43 = sadd.s32 %s24, %s25
      %s44 = sadd.s32 %s38, %s34
      %s45 = ssub.s32 %s23, %s42
      %s46 = ssub.s32 %s43, %s44
      %s47 = sor.u32 %s45, %s46
      %p48 = scmp.eq.s32.totalorder %s47, 0
      %s50 = sadd.s32 %s49, 1
      %s51 = scalar_select %p48, %s49, %s50
      %p54 = pneg %p48
      %p55 = scmp.eq.s32.totalorder %s16, 1
      %p56 = por %p54, %p55
      %p57 = scmp.ne.s32.totalorder %s49, %s52
      %p58 = scmp.eq.s32.totalorder %s16, 0
      %p59 = por %p57, %p58
      %p60 = scmp.ne.s32.totalorder %s49, %s52
      %p61 = scmp.eq.s32.totalorder %s21, 1
      %p62 = por %p60, %p61
      %p63 = scmp.ne.s32.totalorder %s52, %s53
      %p64 = scmp.eq.s32.totalorder %s21, 0
      %p65 = por %p63, %p64
      %p66 = scmp.ne.s32.totalorder %s52, %s53
      %p67 = scmp.eq.s32.totalorder %s22, 1
      %p68 = por %p66, %p67
      %p70 = scmp.ne.s32.totalorder %s53, %s69
      %p71 = scmp.eq.s32.totalorder %s22, 0
      %p72 = por %p70, %p71
      %s74 = sadd.s32 %s73, 1
      %p77 = scmp.eq.s32.totalorder %s16, 1
      %p78 = scmp.ne.s32.totalorder %s73, %s75
      %p79 = scmp.eq.s32.totalorder %s16, 0
      %p80 = por %p78, %p79
      %p81 = scmp.ne.s32.totalorder %s73, %s75
      %p82 = scmp.eq.s32.totalorder %s21, 1
      %p83 = por %p81, %p82
      %p84 = scmp.ne.s32.totalorder %s75, %s76
      %p85 = scmp.eq.s32.totalorder %s21, 0
      %p86 = por %p84, %p85
      %p87 = scmp.ne.s32.totalorder %s75, %s76
      %p88 = scmp.eq.s32.totalorder %s22, 1
      %p89 = por %p87, %p88
      %p91 = scmp.ne.s32.totalorder %s76, %s90
      %p92 = scmp.eq.s32.totalorder %s22, 0
      %p93 = por %p91, %p92
      %s94 = ssub.s32 %s23, %s42
      %s95 = ssub.s32 %s24, %s38
      %s96 = sor.u32 %s94, %s95
      %p97 = scmp.eq.s32.totalorder %s96, 0
      %s99 = sadd.s32 %s98, 1
      %s100 = scalar_select %p97, %s98, %s99
      %p103 = pneg %p97
      %p104 = scmp.eq.s32.totalorder %s16, 1
      %p105 = por %p103, %p104
      %p106 = scmp.ne.s32.totalorder %s98, %s101
      %p107 = scmp.eq.s32.totalorder %s16, 0
      %p108 = por %p106, %p107
      %p109 = scmp.ne.s32.totalorder %s98, %s101
      %p110 = scmp.eq.s32.totalorder %s21, 1
      %p111 = por %p109, %p110
      %p112 = scmp.ne.s32.totalorder %s101, %s102
      %p113 = scmp.eq.s32.totalorder %s21, 0
      %p114 = por %p112, %p113
      %p115 = scmp.ne.s32.totalorder %s101, %s102
      %p116 = scmp.eq.s32.totalorder %s22, 1
      %p117 = por %p115, %p116
      %p119 = scmp.ne.s32.totalorder %s102, %s118
      %p120 = scmp.eq.s32.totalorder %s22, 0
      %p121 = por %p119, %p120
      %s122 = ssub.s32 %s23, %s42
      %s123 = ssub.s32 %s24, %s38
      %s124 = sor.u32 %s122, %s123
      %p125 = scmp.eq.s32.totalorder %s124, 0
      %s127 = sadd.s32 %s126, 1
      %s128 = scalar_select %p125, %s126, %s127
      %p131 = pneg %p125
      %p132 = scmp.eq.s32.totalorder %s16, 1
      %p133 = por %p131, %p132
      %p134 = scmp.ne.s32.totalorder %s126, %s129
      %p135 = scmp.eq.s32.totalorder %s16, 0
      %p136 = por %p134, %p135
      %p137 = scmp.ne.s32.totalorder %s126, %s129
      %p138 = scmp.eq.s32.totalorder %s21, 1
      %p139 = por %p137, %p138
      %p140 = scmp.ne.s32.totalorder %s129, %s130
      %p141 = scmp.eq.s32.totalorder %s21, 0
      %p142 = por %p140, %p141
      %p143 = scmp.ne.s32.totalorder %s129, %s130
      %p144 = scmp.eq.s32.totalorder %s22, 1
      %p145 = por %p143, %p144
      %p147 = scmp.ne.s32.totalorder %s130, %s146
      %p148 = scmp.eq.s32.totalorder %s22, 0
      %p149 = por %p147, %p148
      %p150 = scmp.le.s32.totalorder 1, %s16
      %p151 = scmp.lt.s32.totalorder %s16, 3
      %p152 = pnand %p150, %p151
      %p153 = pneg %p152
      // Predicated region
      $region9: #{tpu_custom_call.1} parent=5 // pred_check
        _
      $region10: #{tpu_custom_call.1} parent=5 // pred_check_branch
        %155 = sbr.rel (%p152) target = $region12
      $region11: #{tpu_custom_call.1} parent=5 // pred_region
        %s156 = ssub.s32 %s16, 1
        // Predicated region
        $region13: #{tpu_custom_call.1} parent=11 // pred_check
          %p157 = pneg %p86
        $region14: #{tpu_custom_call.1} parent=11 // pred_check_branch
          %159 = sbr.rel (%p157) target = $region16
        $region15: #{tpu_custom_call.1} parent=11 // pred_region
          _
        $region16: #{tpu_custom_call.1} parent=11 // pred_fallthru
          _
      $region12: #{tpu_custom_call.1} parent=5 // pred_fallthru
        _
      %p160 = scmp.lt.s32.totalorder %s16, 2
      // Predicated region
      $region17: #{tpu_custom_call.1} parent=5 // pred_check
        %p161 = pneg %p160
      $region18: #{tpu_custom_call.1} parent=5 // pred_check_branch
        %163 = sbr.rel (%p161) target = $region20
      $region19: #{tpu_custom_call.1} parent=5 // pred_region
        // Predicated region
        $region21: #{tpu_custom_call.1} parent=19 // pred_check
          %p164 = pneg %p59
        $region22: #{tpu_custom_call.1} parent=19 // pred_check_branch
          %166 = sbr.rel (%p164) target = $region24
        $region23: #{tpu_custom_call.1} parent=19 // pred_region
          %s167 = sand.u32 %s49, 1
          %s168 = scalar_lea.sflag [#allocation3], %s167
          %s169 = sand.u32 %s49, 1
          %s170 = smul.addr %s169, 8
          %s171 = scalar_lea.vmem [#allocation2], %s170
          %s172 = sadd.s32 %s24, %s25
          %s173 = smul.u32 2, %s172
          %s175 = ssub.s32 128, 128
          %176 = vsyncadd %s168, %s175
          %s177 = smul.addr %s23, 2
          %s178 = sadd.s32 %s173, %s177
          %s179 = smul.addr %s178, 64
          %s180 = scalar_lea.hbm %s0, %s179
          %s182 = sshll.u32 %s171, 4
          %s183 = int_to_ptr.vmem [resolvable:$true] %s182
          %185 = dma.hbm_to_vmem [thread:$0]  %s180, 128, %s183, %s168
        $region24: #{tpu_custom_call.1} parent=19 // pred_fallthru
          _
      $region20: #{tpu_custom_call.1} parent=5 // pred_fallthru
        _
      %p186 = scmp.le.s32.totalorder 1, %s16
      %p187 = scmp.lt.s32.totalorder %s16, 3
      %p188 = pnand %p186, %p187
      %p189 = pneg %p188
      // Predicated region
      $region25: #{tpu_custom_call.1} parent=5 // pred_check
        _
      $region26: #{tpu_custom_call.1} parent=5 // pred_check_branch
        %191 = sbr.rel (%p188) target = $region28
      $region27: #{tpu_custom_call.1} parent=5 // pred_region
        %s192 = ssub.s32 %s16, 1
        %s193 = sand.u32 %s52, 1
        %s194 = scalar_lea.sflag [#allocation3], %s193
        %s195 = sand.u32 %s52, 1
        %s196 = smul.addr %s195, 8
        %s197 = scalar_lea.vmem [#allocation2], %s196
        // Predicated region
        $region29: #{tpu_custom_call.1} parent=27 // pred_check
          %p198 = pneg %p65
        $region30: #{tpu_custom_call.1} parent=27 // pred_check_branch
          %200 = sbr.rel (%p198) target = $region32
        $region31: #{tpu_custom_call.1} parent=27 // pred_region
          %201 = dma.done %s194, 128
        $region32: #{tpu_custom_call.1} parent=27 // pred_fallthru
          _
        %s202 = sand.u32 %s52, 1
        %s203 = scalar_lea.sflag [#allocation3], %s202
        %s204 = sand.u32 %s52, 1
        %s205 = smul.addr %s204, 8
        %s206 = scalar_lea.vmem [#allocation2], %s205
        %p207 = pneg %p65
        %p208 = pneg %p62
        %p209 = pneg %p86
        %p210 = pneg %p83
        %p211 = pneg %p114
        %p212 = pneg %p111
        %s213 = sand.u32 %s101, 1
        %s214 = scalar_lea.sflag [#allocation4], %s213
        %s215 = sand.u32 %s101, 1
        %s216 = smul.addr %s215, 4
        %s217 = scalar_lea.vmem [#allocation5], %s216
        %p218 = pneg %p142
        %p219 = pneg %p139
        %p220 = scmp.lt.s32.totalorder %s26, 1
        %s221 = scalar_select %p220, %s26, 1
        %p222 = scmp.lt.s32.totalorder %s27, 0
        %s223 = scalar_select %p222, %s27, 0
        %s224 = sadd.s32 %s223, %s221
        %s225 = smul.addr %s224, 4
        %s226 = scalar_lea.vmem %s3, %s225
        %s227 = sadd.s32 %s27, %s28
        %s228 = smul.u32 2, %s227
        %p229 = scmp.lt.s32.totalorder %s26, 1
        %s230 = scalar_select %p229, %s26, 1
        %p231 = scmp.lt.s32.totalorder %s27, 0
        %s232 = scalar_select %p231, %s27, 0
        %s233 = sadd.s32 %s232, %s230
        %s234 = smul.addr %s233, 4
        %s235 = scalar_lea.vmem %s3, %s234
        %p236 = scmp.eq.s32.totalorder %s28, 0
        // Predicated region
        $region33: #{tpu_custom_call.1} parent=27 // pred_check
          %p237 = pneg %p236
        $region34: #{tpu_custom_call.1} parent=27 // pred_check_branch
          %239 = sbr.rel (%p237) target = $region36
        $region35: #{tpu_custom_call.1} parent=27 // pred_region
          %vm240 = vcmask 27648
          %241 = vst.msk [vmem:[%s217] sm:$0xf] %vm240, 0.0
          %vm242 = vcmask 3072
          %243 = vst.msk [vmem:[%s235] sm:$0xf] %vm242, 0.0
        $region36: #{tpu_custom_call.1} parent=27 // pred_fallthru
          _
        %v244 = vld [vmem:[%s197] sm:$0xff]
        %v245 = vld [vmem:[%s1] sm:$0xf]
        %247 = vset.pattern.permute.xlu0 0
        %248 = vperm.xlu0 %247, %v245
        %v249 = vpop.permute.xlu0 %248
        %v251 = vunpack.c.l.s4 839922192
        %v252 = vunpack.c.0.s8 %v251
        %v253 = vlaneseq
        %v254 = vshrl.u32 %v253, 7
        %v255 = vsub.s32 %v252, %v254
        %v256 = vrot.slane %v249, %v255
        %v258 = vsub.f32 %v244, %v256
        %v259 = vld [vmem:[%s217] sm:$0xf]
        %v261 = vcombine.high %v258, %v258
        %263 = vmatprep.subr.mxu0 %v261
        %264 = vmatpush1.xpose.msra.mxu0 %v258
        %265 = vmatprep.subr.mxu0 0.0
        %266 = vmatpush1.xpose.msra.mxu0 0.0
        %267 = vmatprep.subr.mxu0 0.0
        %268 = vmatpush1.xpose.msra.mxu0 0.0
        %269 = vmatprep.subr.mxu0 0.0
        %270 = vmatpush1.xpose.msra.mxu0 0.0
        %271 = vmatprep.subr.mxu0 0.0
        %272 = vmatpush1.xpose.msra.mxu0 0.0
        %273 = vmatprep.subr.mxu0 0.0
        %274 = vmatpush1.xpose.msra.mxu0 0.0
        %275 = vmatprep.subr.mxu0 0.0
        %276 = vmatpush1.xpose.msra.mxu0 0.0
        %277 = vmatprep.subr.mxu0 0.0
        %278 = vmatpush1.xpose.msra.mxu0 0.0
        %279 = vmatprep.subr.mxu0 0.0
        %280 = vmatpush1.xpose.msra.mxu0 0.0
        %281 = vmatprep.subr.mxu0 0.0
        %282 = vmatpush1.xpose.msra.mxu0 0.0
        %283 = vmatprep.subr.mxu0 0.0
        %284 = vmatpush1.xpose.msra.mxu0 0.0
        %285 = vmatprep.subr.mxu0 0.0
        %286 = vmatpush1.xpose.msra.mxu0 0.0
        %287 = vmatprep.subr.mxu0 0.0
        %288 = vmatpush1.xpose.msra.mxu0 0.0
        %289 = vmatprep.subr.mxu0 0.0
        %290 = vmatpush1.xpose.msra.mxu0 0.0
        %291 = vmatprep.subr.mxu0 0.0
        %292 = vmatpush1.xpose.msra.mxu0 0.0
        %293 = vmatprep.subr.mxu0 0.0
        %294 = vmatpush1.xpose.msra.mxu0 0.0
        %295 = vmatprep.subr.mxu0 0.0
        %296 = vmatpush1.xpose.msra.mxu0 0.0
        %297 = vmatprep.subr.mxu0 0.0
        %298 = vmatpush1.xpose.msra.mxu0 0.0
        %299 = vmatprep.subr.mxu0 0.0
        %300 = vmatpush1.xpose.msra.mxu0 0.0
        %301 = vmatprep.subr.mxu0 0.0
        %302 = vmatpush1.xpose.msra.mxu0 0.0
        %303 = vmatprep.subr.mxu0 0.0
        %304 = vmatpush1.xpose.msra.mxu0 0.0
        %305 = vmatprep.subr.mxu0 0.0
        %306 = vmatpush1.xpose.msra.mxu0 0.0
        %307 = vmatprep.subr.mxu0 0.0
        %308 = vmatpush1.xpose.msra.mxu0 0.0
        %309 = vmatprep.subr.mxu0 0.0
        %310 = vmatpush1.xpose.msra.mxu0 0.0
        %311 = vmatprep.subr.mxu0 0.0
        %312 = vmatpush1.xpose.msra.mxu0 0.0
        %313 = vmatprep.subr.mxu0 0.0
        %314 = vmatpush1.xpose.msra.mxu0 0.0
        %315 = vmatprep.subr.mxu0 0.0
        %316 = vmatpush1.xpose.msra.mxu0 0.0
        %317 = vmatprep.subr.mxu0 0.0
        %318 = vmatpush1.xpose.msra.mxu0 0.0
        %319 = vmatprep.subr.mxu0 0.0
        %320 = vmatpush1.xpose.msra.mxu0 0.0
        %321 = vmatprep.subr.mxu0 0.0
        %322 = vmatpush1.xpose.msra.mxu0 0.0
        %323 = vmatprep.subr.mxu0 0.0
        %324 = vmatpush1.xpose.msra.mxu0 0.0
        %325 = vmatprep.subr.mxu0 0.0
        %326 = vmatpush1.xpose.msra.mxu0 0.0
        %327 = vmatprep.mubr.f32.mxu0 %v261
        %328 = vmatmul.mubr.f32.gmra.mrb[0].mxu0 %v258
        %v329 = vpop.f32.mrb[0].mxu0
        %v330 = vadd.f32 0.0, %v329
        %v331 = vpop.f32.mrb[0].mxu0
        %332 = vdwg.mxu0
        %v333 = vadd.f32 %v259, %v330
        %vm334 = vcmask 27648
        %335 = vst.msk [vmem:[%s217] sm:$0xf] %vm334, %v333
        %v336 = vld [vmem:[%s235] sm:$0xf]
        %vm337 = vcmask 1043456
        %v338 = vsel %vm337, %v258, 0.0
        %v339 = vsel %vm337, %v261, 0.0
        %v340 = vadd.f32 %v338, %v339
        %341 = vadd.xlane.f32.xlu0 %v340
        %v342 = vpop.xlane.xlu0 %341
        %v343 = vadd.f32 %v336, %v342
        %vm344 = vcmask 3072
        %345 = vst.msk [vmem:[%s235] sm:$0xf] %vm344, %v343
        %s346 = sand.u32 %s101, 1
        %s347 = scalar_lea.sflag [#allocation4], %s346
        %s348 = sand.u32 %s101, 1
        %s349 = smul.addr %s348, 4
        %s350 = scalar_lea.vmem [#allocation5], %s349
        %p351 = scmp.lt.s32.totalorder %s26, 1
        %s352 = scalar_select %p351, %s26, 1
        %p353 = scmp.lt.s32.totalorder %s27, 0
        %s354 = scalar_select %p353, %s27, 0
        %s355 = sadd.s32 %s354, %s352
        %s356 = smul.addr %s355, 4
        %s357 = scalar_lea.vmem %s3, %s356
        // Predicated region
        $region37: #{tpu_custom_call.1} parent=27 // pred_check
          %p358 = pneg %p111
        $region38: #{tpu_custom_call.1} parent=27 // pred_check_branch
          %360 = sbr.rel (%p358) target = $region40
        $region39: #{tpu_custom_call.1} parent=27 // pred_region
          %s362 = ssub.s32 64, 64
          %363 = vsyncadd %s347, %s362
          %s364 = sadd.s32 %s27, %s26
          %s365 = smul.addr %s364, 64
          %s366 = scalar_lea.hbm %s2, %s365
          %s368 = sshll.u32 %s350, 4
          %s369 = int_to_ptr.vmem [resolvable:$true] %s368
          %371 = dma.vmem_to_hbm [thread:$0]  %s369, 64, %s366, %s347
        $region40: #{tpu_custom_call.1} parent=27 // pred_fallthru
          _
        // Predicated region
        $region41: #{tpu_custom_call.1} parent=27 // pred_check
          %p372 = pneg %p139
        $region42: #{tpu_custom_call.1} parent=27 // pred_check_branch
          %374 = sbr.rel (%p372) target = $region44
        $region43: #{tpu_custom_call.1} parent=27 // pred_region
          _
        $region44: #{tpu_custom_call.1} parent=27 // pred_fallthru
          _
      $region28: #{tpu_custom_call.1} parent=5 // pred_fallthru
        _
      %p375 = scmp.le.s32.totalorder 2, %s16
      // Predicated region
      $region45: #{tpu_custom_call.1} parent=5 // pred_check
        %p376 = pneg %p375
      $region46: #{tpu_custom_call.1} parent=5 // pred_check_branch
        %378 = sbr.rel (%p376) target = $region48
      $region47: #{tpu_custom_call.1} parent=5 // pred_region
        %s379 = ssub.s32 %s16, 2
        // Predicated region
        $region49: #{tpu_custom_call.1} parent=47 // pred_check
          %p380 = pneg %p117
        $region50: #{tpu_custom_call.1} parent=47 // pred_check_branch
          %382 = sbr.rel (%p380) target = $region52
        $region51: #{tpu_custom_call.1} parent=47 // pred_region
          %s383 = sand.u32 %s102, 1
          %s384 = scalar_lea.sflag [#allocation4], %s383
          %s385 = sand.u32 %s102, 1
          %s386 = smul.addr %s385, 4
          %s387 = scalar_lea.vmem [#allocation5], %s386
          %388 = dma.done %s384, 64
        $region52: #{tpu_custom_call.1} parent=47 // pred_fallthru
          _
        // Predicated region
        $region53: #{tpu_custom_call.1} parent=47 // pred_check
          %p389 = pneg %p145
        $region54: #{tpu_custom_call.1} parent=47 // pred_check_branch
          %391 = sbr.rel (%p389) target = $region56
        $region55: #{tpu_custom_call.1} parent=47 // pred_region
          %p392 = scmp.lt.s32.totalorder %s29, 1
          %s393 = scalar_select %p392, %s29, 1
          %p394 = scmp.lt.s32.totalorder %s30, 0
          %s395 = scalar_select %p394, %s30, 0
          %s396 = sadd.s32 %s395, %s393
          %s397 = smul.addr %s396, 4
          %s398 = scalar_lea.vmem %s3, %s397
        $region56: #{tpu_custom_call.1} parent=47 // pred_fallthru
          _
      $region48: #{tpu_custom_call.1} parent=5 // pred_fallthru
        _
    $region6: #{tpu_custom_call.1} parent=1 // loop_footer
      %s20 = sadd.s32 1, %s16
    $region7: #{tpu_custom_call.1} parent=1 // loop_footer_branch
      %15 = sbr.rel target = $region3
    $region8: #{tpu_custom_call.1} parent=1 // loop_exit
      _
    %399 = vsyncpa [#allocation3], 1
    %s400 = scalar_lea.sflag [#allocation3], 1
    %401 = vsyncpa %s400, 1
    %402 = vsyncpa [#allocation4], 1
    %s403 = scalar_lea.sflag [#allocation4], 1
    %404 = vsyncpa %s403, 1

</llo_original>
